<compile_context>
chip_gen: v5e
topology: v5e:2x2
jax: 0.10.0
libtpu: 0.0.40
codegen_flags: <defaults>
</compile_context>

<pallas_src>
import jax
import jax.numpy as jnp
from jax.experimental import pallas as pl
from jax.experimental.pallas import tpu as pltpu

_LANES = 128


def _exp_kernel(x_ref, o_ref):
    # Elementwise exp on the full VMEM tile (EUP handles the transcendental).
    o_ref[...] = jnp.exp(x_ref[...])


def _choose_tile_rows(rows, itemsize, target_block_bytes=4 << 20):
    """Pick a sublane-aligned row-tile ~target_block_bytes big.

    - multiple of the sublane packing granularity (8 rows for 32-bit,
      16 for 16-bit, 32 for 8-bit dtypes)
    - ~4 MiB per block => 4 double-buffered in/out buffers ~= 16 MiB,
      safe on v5e (16->48 MiB raised), v6e (32/128 MiB) and v7x (32/64 MiB)
    - for small inputs, split into >= 2 blocks so v7x's two TensorCores
      both stream (grid axis is marked "parallel").
    """
    pack = max(8, 32 // max(1, itemsize))
    tr = max(pack, (target_block_bytes // (_LANES * itemsize)) // pack * pack)
    if rows <= tr:
        if rows <= pack:
            return rows  # single full-extent block (legal: equals array dim)
        half = (rows + 1) // 2
        tr = ((half + pack - 1) // pack) * pack
    return tr


def exponential(x):
    """Elementwise exp via a Pallas TPU kernel. Matches torch.exp(tensor)."""
    orig_shape = x.shape
    n = x.size
    itemsize = jnp.dtype(x.dtype).itemsize

    # Flatten to a lane-dense 2D slab (rows, 128). Pad only when numel is not
    # already a multiple of 128; the padded tail is discarded after the kernel.
    n_pad = ((n + _LANES - 1) // _LANES) * _LANES
    x_flat = jnp.ravel(x)
    if n_pad != n:
        x_flat = jnp.concatenate(
            [x_flat, jnp.zeros((n_pad - n,), dtype=x_flat.dtype)]
        )
    rows = n_pad // _LANES
    x2d = x_flat.reshape(rows, _LANES)

    tr = _choose_tile_rows(rows, itemsize)
    # Ragged final block handled by Pallas (masked write) -- no tr shrinking.
    grid = (pl.cdiv(rows, tr),)

    out2d = pl.pallas_call(
        _exp_kernel,
        out_shape=jax.ShapeDtypeStruct((rows, _LANES), x2d.dtype),
        grid_spec=pltpu.PrefetchScalarGridSpec(
            num_scalar_prefetch=0,
            grid=grid,
            in_specs=[pl.BlockSpec((tr, _LANES), lambda i: (i, 0))],
            out_specs=pl.BlockSpec((tr, _LANES), lambda i: (i, 0)),
        ),
        compiler_params=pltpu.CompilerParams(
            dimension_semantics=("parallel",),
            vmem_limit_bytes=48 << 20,
        ),
        cost_estimate=pl.CostEstimate(
            flops=0,
            transcendentals=n,
            bytes_accessed=2 * n * itemsize,
        ),
    )(x2d)

    if n_pad == n:
        # No pad was added: reshape is free, no slice/copy on the output.
        return out2d.reshape(orig_shape)
    return out2d.reshape(-1)[:n].reshape(orig_shape)


if __name__ == "__main__":
    key = jax.random.PRNGKey(0)
    # Small NCHW-style input consistent with the module's usage.
    x = jax.random.normal(key, (2, 4, 16, 16), dtype=jnp.float32)

    y = exponential(x)
    y = jax.block_until_ready(y)

    # Correctness check against plain JAX reference.
    y_ref = jnp.exp(x)
    assert y.shape == x.shape and y.dtype == x.dtype
    assert jnp.allclose(y, y_ref, rtol=1e-6, atol=1e-6)

    print("KERNEL_OK")
</pallas_src>

<mosaic_0001>
module attributes {stable_mosaic.version = 11 : i64} {
  func.func @_exp_kernel(%arg0: i32, %arg1: memref<8x128xf32, #tpu.memory_space<vmem>>, %arg2: memref<8x128xf32, #tpu.memory_space<vmem>>) attributes {dimension_semantics = [#tpu.dimension_semantics<parallel>], iteration_bounds = array<i64: 2>, scalar_prefetch = 0 : i64, scratch_operands = 0 : i64, tpu.core_type = #tpu.core_type<tc>, window_params = [{transform_indices = @transform_0, window_bounds = array<i64: 8, 128>}, {transform_indices = @transform_1, window_bounds = array<i64: 8, 128>}]} {
    %c0 = arith.constant 0 : index
    %c0_0 = arith.constant 0 : index
    %0 = vector.load %arg1[%c0, %c0_0] : memref<8x128xf32, #tpu.memory_space<vmem>>, vector<8x128xf32>
    %1 = math.exp %0 : vector<8x128xf32>
    %c0_1 = arith.constant 0 : index
    %c0_2 = arith.constant 0 : index
    %2 = vector.load %arg2[%c0_1, %c0_2] : memref<8x128xf32, #tpu.memory_space<vmem>>, vector<8x128xf32>
    tpu.vector_store %arg2[%c0_1, %c0_2], %1 {strides = array<i32>} : memref<8x128xf32, #tpu.memory_space<vmem>>, vector<8x128xf32>,
    return
  }
  func.func @transform_0(%arg0: i32) -> (i32, i32) {
    %c0_i32 = arith.constant 0 : i32
    %c0_i32_0 = arith.constant 0 : i32
    return %arg0, %c0_i32 : i32, i32
  }
  func.func @transform_1(%arg0: i32) -> (i32, i32) {
    %c0_i32 = arith.constant 0 : i32
    %c0_i32_0 = arith.constant 0 : i32
    return %arg0, %c0_i32 : i32, i32
  }
}

</mosaic_0001>

<llo_original>
// kernel: tpu_custom_call.1
$region0: #{tpu_custom_call.1}
  #allocation0 [shape = 'u32[]', space=smem, size = 0x4, offset = 0x4, fixed_abs, tag = 'smem constant byte address 0x4 - core index']
  #allocation1 [shape = 'u32[72,128]{1,0:T(1,128)}', space=vmem, size = 0x9000, scoped, tag = 'internal scratch']
  %s0 = inlined_call_operand.hbm [shape: f32[16,128], index: 0, kind: input, shape index: {}]
  %s1 = inlined_call_operand.hbm [shape: f32[16,128], index: 1, kind: output, shape index: {}]
  %s2 = sld [smem:[#allocation0]]
  $region41: #{tpu_custom_call.1} parent=0
    _
  %s4 = ssub.s32 1, %s2
  %s5 = scalar_select 0, %s4, %s2
  $region1: #{tpu_custom_call.1} parent=0
    #allocation2 [shape = 'u8[8192]{0}', space=vmem, size = 0x2000, scoped, tag = 'input window, operand 0']
    #allocation3 [shape = 's32[2]{0}', space=sflag, size = 0x8, scoped, tag = 'scoped memory for tpu_custom_call.1']
    #allocation4 [shape = 's32[2]{0}', space=sflag, size = 0x8, scoped, tag = 'scoped memory for tpu_custom_call.1']
    #allocation5 [shape = 'u8[8192]{0}', space=vmem, size = 0x2000, scoped, tag = 'output window, operand 0']
    %6 = vsyncpa [#allocation3], 0
    %s7 = scalar_lea.sflag [#allocation3], 1
    %8 = vsyncpa %s7, 0
    %9 = vsyncpa [#allocation4], 0
    %s10 = scalar_lea.sflag [#allocation4], 1
    %11 = vsyncpa %s10, 0
    loop: start=0, step=1, limit=4
    $region2: #{tpu_custom_call.1} parent=1 // loop_pre_header
      _
    $region3: #{tpu_custom_call.1} parent=1 // loop_header
      %s13 = sphi 0, %s17
      %p14 = scmp.ge.s32.totalorder %s13, 4
      %s23 = sphi 0, %s25
      %s26 = sphi 0, %s23
      %s27 = sphi 0, %s26
      %s43 = sphi 0, %s27
      %s49 = sphi 0, %s51
      %s52 = sphi 0, %s49
      %s53 = sphi 0, %s52
      %s69 = sphi 0, %s53
    $region4: #{tpu_custom_call.1} parent=1 // loop_header_branch
      %16 = sbr.rel (%p14) target = $region8
    $region5: #{tpu_custom_call.1} parent=1 // loop_body
      %s18 = ssub.s32 %s13, 1
      %s19 = ssub.s32 %s13, 2
      %s20 = sadd.s32 %s13, 1
      %s21 = ssub.s32 %s13, %s20
      %p22 = scmp.eq.s32.totalorder %s21, 0
      %s24 = sadd.s32 %s23, 1
      %s25 = scalar_select %p22, %s23, %s24
      %p28 = pneg %p22
      %p29 = scmp.eq.s32.totalorder %s13, 1
      %p30 = por %p28, %p29
      %p31 = scmp.ne.s32.totalorder %s23, %s26
      %p32 = scmp.eq.s32.totalorder %s13, 0
      %p33 = por %p31, %p32
      %p34 = scmp.ne.s32.totalorder %s23, %s26
      %p35 = scmp.eq.s32.totalorder %s18, 1
      %p36 = por %p34, %p35
      %p37 = scmp.ne.s32.totalorder %s26, %s27
      %p38 = scmp.eq.s32.totalorder %s18, 0
      %p39 = por %p37, %p38
      %p40 = scmp.ne.s32.totalorder %s26, %s27
      %p41 = scmp.eq.s32.totalorder %s19, 1
      %p42 = por %p40, %p41
      %p44 = scmp.ne.s32.totalorder %s27, %s43
      %p45 = scmp.eq.s32.totalorder %s19, 0
      %p46 = por %p44, %p45
      %s47 = ssub.s32 %s13, %s20
      %p48 = scmp.eq.s32.totalorder %s47, 0
      %s50 = sadd.s32 %s49, 1
      %s51 = scalar_select %p48, %s49, %s50
      %p54 = pneg %p48
      %p55 = scmp.eq.s32.totalorder %s13, 1
      %p56 = por %p54, %p55
      %p57 = scmp.ne.s32.totalorder %s49, %s52
      %p58 = scmp.eq.s32.totalorder %s13, 0
      %p59 = por %p57, %p58
      %p60 = scmp.ne.s32.totalorder %s49, %s52
      %p61 = scmp.eq.s32.totalorder %s18, 1
      %p62 = por %p60, %p61
      %p63 = scmp.ne.s32.totalorder %s52, %s53
      %p64 = scmp.eq.s32.totalorder %s18, 0
      %p65 = por %p63, %p64
      %p66 = scmp.ne.s32.totalorder %s52, %s53
      %p67 = scmp.eq.s32.totalorder %s19, 1
      %p68 = por %p66, %p67
      %p70 = scmp.ne.s32.totalorder %s53, %s69
      %p71 = scmp.eq.s32.totalorder %s19, 0
      %p72 = por %p70, %p71
      %p73 = scmp.le.s32.totalorder 1, %s13
      %p74 = scmp.lt.s32.totalorder %s13, 3
      %p75 = pnand %p73, %p74
      %p76 = pneg %p75
      // Predicated region
      $region9: #{tpu_custom_call.1} parent=5 // pred_check
        _
      $region10: #{tpu_custom_call.1} parent=5 // pred_check_branch
        %78 = sbr.rel (%p75) target = $region12
      $region11: #{tpu_custom_call.1} parent=5 // pred_region
        %s79 = ssub.s32 %s13, 1
      $region12: #{tpu_custom_call.1} parent=5 // pred_fallthru
        _
      %p80 = scmp.lt.s32.totalorder %s13, 2
      // Predicated region
      $region13: #{tpu_custom_call.1} parent=5 // pred_check
        %p81 = pneg %p80
      $region14: #{tpu_custom_call.1} parent=5 // pred_check_branch
        %83 = sbr.rel (%p81) target = $region16
      $region15: #{tpu_custom_call.1} parent=5 // pred_region
        // Predicated region
        $region17: #{tpu_custom_call.1} parent=15 // pred_check
          %p84 = pneg %p33
        $region18: #{tpu_custom_call.1} parent=15 // pred_check_branch
          %86 = sbr.rel (%p84) target = $region20
        $region19: #{tpu_custom_call.1} parent=15 // pred_region
          %s87 = sand.u32 %s23, 1
          %s88 = scalar_lea.sflag [#allocation3], %s87
          %s89 = sand.u32 %s23, 1
          %s90 = smul.addr %s89, 8
          %s91 = scalar_lea.vmem [#allocation2], %s90
          %93 = vsyncadd %s88, 0
          %s94 = smul.addr %s13, 8
          %s95 = scalar_lea.hbm %s0, %s94
          %s97 = sshll.u32 %s95, 4
          %s98 = int_to_ptr.hbm [resolvable:$true] %s97
          %s99 = sshll.u32 %s91, 4
          %s100 = int_to_ptr.vmem [resolvable:$true] %s99
          %102 = dma.hbm_to_vmem [thread:$0]  %s98, 128, %s100, %s88
        $region20: #{tpu_custom_call.1} parent=15 // pred_fallthru
          _
      $region16: #{tpu_custom_call.1} parent=5 // pred_fallthru
        _
      %p103 = scmp.le.s32.totalorder 1, %s13
      %p104 = scmp.lt.s32.totalorder %s13, 3
      %p105 = pnand %p103, %p104
      %p106 = pneg %p105
      // Predicated region
      $region21: #{tpu_custom_call.1} parent=5 // pred_check
        _
      $region22: #{tpu_custom_call.1} parent=5 // pred_check_branch
        %108 = sbr.rel (%p105) target = $region24
      $region23: #{tpu_custom_call.1} parent=5 // pred_region
        %s109 = ssub.s32 %s13, 1
        %s110 = sand.u32 %s26, 1
        %s111 = scalar_lea.sflag [#allocation3], %s110
        %s112 = sand.u32 %s26, 1
        %s113 = smul.addr %s112, 8
        %s114 = scalar_lea.vmem [#allocation2], %s113
        // Predicated region
        $region25: #{tpu_custom_call.1} parent=23 // pred_check
          %p115 = pneg %p39
        $region26: #{tpu_custom_call.1} parent=23 // pred_check_branch
          %117 = sbr.rel (%p115) target = $region28
        $region27: #{tpu_custom_call.1} parent=23 // pred_region
          %119 = dma.done %s111, 128
        $region28: #{tpu_custom_call.1} parent=23 // pred_fallthru
          _
        %s120 = sand.u32 %s26, 1
        %s121 = scalar_lea.sflag [#allocation3], %s120
        %s122 = sand.u32 %s26, 1
        %s123 = smul.addr %s122, 8
        %s124 = scalar_lea.vmem [#allocation2], %s123
        %p125 = pneg %p39
        %p126 = pneg %p36
        %p127 = pneg %p65
        %p128 = pneg %p62
        %s129 = sand.u32 %s52, 1
        %s130 = scalar_lea.sflag [#allocation4], %s129
        %s131 = sand.u32 %s52, 1
        %s132 = smul.addr %s131, 8
        %s133 = scalar_lea.vmem [#allocation5], %s132
        %v134 = vld [vmem:[%s114] sm:$0xff]
        %v135 = vmul.f32 %v134, 1.442695
        %v136 = vpow.pop %v135
        %137 = vst [vmem:[%s133] sm:$0xff] %v136
        %s138 = sand.u32 %s52, 1
        %s139 = scalar_lea.sflag [#allocation4], %s138
        %s140 = sand.u32 %s52, 1
        %s141 = smul.addr %s140, 8
        %s142 = scalar_lea.vmem [#allocation5], %s141
        // Predicated region
        $region29: #{tpu_custom_call.1} parent=23 // pred_check
          %p143 = pneg %p62
        $region30: #{tpu_custom_call.1} parent=23 // pred_check_branch
          %145 = sbr.rel (%p143) target = $region32
        $region31: #{tpu_custom_call.1} parent=23 // pred_region
          %147 = vsyncadd %s139, 0
          %s148 = smul.addr %s18, 8
          %s149 = scalar_lea.hbm %s1, %s148
          %s151 = sshll.u32 %s142, 4
          %s152 = int_to_ptr.vmem [resolvable:$true] %s151
          %s153 = sshll.u32 %s149, 4
          %s154 = int_to_ptr.hbm [resolvable:$true] %s153
          %156 = dma.vmem_to_hbm [thread:$0]  %s152, 128, %s154, %s139
        $region32: #{tpu_custom_call.1} parent=23 // pred_fallthru
          _
      $region24: #{tpu_custom_call.1} parent=5 // pred_fallthru
        _
      %p157 = scmp.le.s32.totalorder 2, %s13
      // Predicated region
      $region33: #{tpu_custom_call.1} parent=5 // pred_check
        %p158 = pneg %p157
      $region34: #{tpu_custom_call.1} parent=5 // pred_check_branch
        %160 = sbr.rel (%p158) target = $region36
      $region35: #{tpu_custom_call.1} parent=5 // pred_region
        %s161 = ssub.s32 %s13, 2
        // Predicated region
        $region37: #{tpu_custom_call.1} parent=35 // pred_check
          %p162 = pneg %p68
        $region38: #{tpu_custom_call.1} parent=35 // pred_check_branch
          %164 = sbr.rel (%p162) target = $region40
        $region39: #{tpu_custom_call.1} parent=35 // pred_region
          %s165 = sand.u32 %s53, 1
          %s166 = scalar_lea.sflag [#allocation4], %s165
          %s167 = sand.u32 %s53, 1
          %s168 = smul.addr %s167, 8
          %s169 = scalar_lea.vmem [#allocation5], %s168
          %171 = dma.done %s166, 128
        $region40: #{tpu_custom_call.1} parent=35 // pred_fallthru
          _
      $region36: #{tpu_custom_call.1} parent=5 // pred_fallthru
        _
    $region6: #{tpu_custom_call.1} parent=1 // loop_footer
      %s17 = sadd.s32 1, %s13
    $region7: #{tpu_custom_call.1} parent=1 // loop_footer_branch
      %12 = sbr.rel target = $region3
    $region8: #{tpu_custom_call.1} parent=1 // loop_exit
      _
    %172 = vsyncpa [#allocation3], 1
    %s173 = scalar_lea.sflag [#allocation3], 1
    %174 = vsyncpa %s173, 1
    %175 = vsyncpa [#allocation4], 1
    %s176 = scalar_lea.sflag [#allocation4], 1
    %177 = vsyncpa %s176, 1

</llo_original>
